<compile_context>
chip_gen: v7x
topology: tpu7x:2x2x1
jax: 0.10.0
libtpu: 0.0.40
codegen_flags: <defaults>
</compile_context>

<pallas_src>
import functools

import jax
import jax.numpy as jnp
import numpy as np
from jax.experimental import pallas as pl
from jax.experimental.pallas import tpu as pltpu

LANE = 128
SUBLANE = 8


def _round_up(x, m):
    return ((x + m - 1) // m) * m


def _decoder_kernel(z_ref, w1_ref, b1_ref, w2_ref, b2_ref, out_ref):
    # fc1: relu(z @ W1 + b1).  Activations are cast to the weight dtype only at
    # the MXU boundary; bias add / ReLU / sigmoid stay f32 on the VPU/EUP
    # (native f32 on all of v5e/v6e/v7x).
    h = jnp.dot(z_ref[...].astype(w1_ref.dtype), w1_ref[...],
                preferred_element_type=jnp.float32)
    h = jnp.maximum(h + b1_ref[...], 0.0)
    # fc2: sigmoid(h @ W2 + b2)  (f32 accumulate, sigmoid on EUP).
    y = jnp.dot(h.astype(w2_ref.dtype), w2_ref[...],
                preferred_element_type=jnp.float32)
    out_ref[...] = jax.nn.sigmoid(y + b2_ref[...]).astype(out_ref.dtype)


def prepare_params(w1, b1, w2, b2, weight_dtype=jnp.float32):
    """One-time layout prep (call once at init, NOT per forward).

    Zero-pads latent / hidden / output dims up to multiples of 128 so the MXU
    contraction and output dims are unmasked/lane-dense, and casts weights to
    `weight_dtype` (bf16 halves the weight DMA and gets bf16 MXU rates on
    v6e/v7x).  Biases stay f32 for the VPU elementwise path.
    """
    latent, hidden = w1.shape
    out_dim = w2.shape[1]
    lat_p, hid_p, out_p = (_round_up(d, LANE) for d in (latent, hidden, out_dim))
    w1p = jnp.zeros((lat_p, hid_p), weight_dtype).at[:latent, :hidden].set(
        w1.astype(weight_dtype))
    b1p = jnp.zeros((1, hid_p), jnp.float32).at[:, :hidden].set(
        b1.reshape(1, hidden).astype(jnp.float32))
    w2p = jnp.zeros((hid_p, out_p), weight_dtype).at[:hidden, :out_dim].set(
        w2.astype(weight_dtype))
    b2p = jnp.zeros((1, out_p), jnp.float32).at[:, :out_dim].set(
        b2.reshape(1, out_dim).astype(jnp.float32))
    return (w1p, b1p, w2p, b2p), out_dim


@functools.partial(jax.jit, static_argnames=("out_dim", "block_m", "block_n"))
def base_vae_decoder(z, w1, b1, w2, b2, *, out_dim, block_m=256, block_n=512):
    """Fused BaseVAEDecoder forward: sigmoid(relu(z @ W1 + b1) @ W2 + b2).

    w1/b1/w2/b2 must come from `prepare_params` (128-padded, weights possibly
    bf16).  `z` may have any batch / unpadded latent; it is padded here and the
    result is sliced back to (B, out_dim).  block_m should be a multiple of 8
    (256 fills the v6e/v7x 256x256 MXU; 128 matches v5e's MXU height).
    """
    B, latent = z.shape
    lat_p, hid_p = w1.shape
    out_p = w2.shape[1]

    # ---- tile sizes ------------------------------------------------------
    b_pad = _round_up(B, SUBLANE)
    tm = block_m if b_pad >= block_m else b_pad          # MXU-height batch tile
    b_pad = _round_up(b_pad, tm)
    tn = min(block_n, out_p)                             # lane-dense N tile
    while out_p % tn:                                    # must divide padded N
        tn -= LANE

    # Pad z along batch and K (latent) — cheap per-call layout plumbing.
    zp = z
    if (b_pad, lat_p) != (B, latent):
        zp = jnp.zeros((b_pad, lat_p), z.dtype).at[:B, :latent].set(z)

    grid = (b_pad // tm, out_p // tn)

    w_bytes = jnp.dtype(w1.dtype).itemsize
    cost = pl.CostEstimate(
        flops=int(2 * b_pad * lat_p * hid_p * grid[1] + 2 * b_pad * hid_p * out_p),
        transcendentals=int(b_pad * out_p),
        bytes_accessed=int(zp.size * zp.dtype.itemsize
                           + (w1.size + w2.size) * w_bytes
                           + (b1.size + b2.size) * 4
                           + b_pad * out_p * zp.dtype.itemsize),
    )
    # Per-step VMEM (pipeline double-buffers every blocked input/output).
    vmem_est = 2 * (tm * lat_p * 4 + lat_p * hid_p * w_bytes + hid_p * 4
                    + hid_p * tn * w_bytes + tn * 4 + tm * tn * 4)
    vmem_limit = int(min(max(2 * vmem_est, 32 * 1024 * 1024), 64 * 1024 * 1024))

    out = pl.pallas_call(
        _decoder_kernel,
        out_shape=jax.ShapeDtypeStruct((b_pad, out_p), z.dtype),
        grid=grid,
        in_specs=[
            pl.BlockSpec((tm, lat_p), lambda i, j: (i, 0)),     # z batch tile
            pl.BlockSpec((lat_p, hid_p), lambda i, j: (0, 0)),  # W1 (VMEM-resident)
            pl.BlockSpec((1, hid_p), lambda i, j: (0, 0)),      # b1 (VMEM-resident)
            pl.BlockSpec((hid_p, tn), lambda i, j: (0, j)),     # W2 N-tile
            pl.BlockSpec((1, tn), lambda i, j: (0, j)),         # b2 N-tile
        ],
        out_specs=pl.BlockSpec((tm, tn), lambda i, j: (i, j)),
        compiler_params=pltpu.CompilerParams(
            # Both grid axes are independent -> shard across the 2 TensorCores
            # on v7x; no-op on single-TC v5e/v6e.
            dimension_semantics=("parallel", "parallel"),
            vmem_limit_bytes=vmem_limit,
        ),
        cost_estimate=cost,
    )(zp, w1, b1, w2, b2)
    return out[:B, :out_dim]


def init_params(key, latent_dim, output_dim, dtype=jnp.float32):
    """nn.Linear-style uniform init; weights stored as [in, out]."""
    hidden = 2 * latent_dim
    k1, k2, k3, k4 = jax.random.split(key, 4)
    bound1 = 1.0 / np.sqrt(latent_dim)
    bound2 = 1.0 / np.sqrt(hidden)
    w1 = jax.random.uniform(k1, (latent_dim, hidden), dtype, -bound1, bound1)
    b1 = jax.random.uniform(k2, (hidden,), dtype, -bound1, bound1)
    w2 = jax.random.uniform(k3, (hidden, output_dim), dtype, -bound2, bound2)
    b2 = jax.random.uniform(k4, (output_dim,), dtype, -bound2, bound2)
    return w1, b1, w2, b2


def reference(z, w1, b1, w2, b2):
    h = jax.nn.relu(z @ w1 + b1)
    return jax.nn.sigmoid(h @ w2 + b2)


if __name__ == "__main__":
    latent_dim, output_dim, batch = 32, 64, 8

    key = jax.random.PRNGKey(0)
    kz, kp, kz2 = jax.random.split(key, 3)
    z = jax.random.normal(kz, (batch, latent_dim), jnp.float32)
    w1, b1, w2, b2 = init_params(kp, latent_dim, output_dim)
    ref = reference(z, w1, b1, w2, b2)

    # f32 weights: exact-path check at tight tolerance (toy B=8, single tile).
    (p1, p2, p3, p4), od = prepare_params(w1, b1, w2, b2, jnp.float32)
    out = jax.block_until_ready(base_vae_decoder(z, p1, p2, p3, p4, out_dim=od))
    np.testing.assert_allclose(np.asarray(out), np.asarray(ref),
                               atol=1e-5, rtol=1e-5)

    # bf16 weights (f32 accumulate) + multi-tile batch grid (non-divisible B).
    z_big = jax.random.normal(kz2, (300, latent_dim), jnp.float32)
    ref_big = reference(z_big, w1, b1, w2, b2)
    (q1, q2, q3, q4), od = prepare_params(w1, b1, w2, b2, jnp.bfloat16)
    out_big = jax.block_until_ready(
        base_vae_decoder(z_big, q1, q2, q3, q4, out_dim=od, block_m=128))
    np.testing.assert_allclose(np.asarray(out_big), np.asarray(ref_big),
                               atol=2e-2, rtol=2e-2)

    print("KERNEL_OK")
</pallas_src>

<mosaic_0001>
module attributes {stable_mosaic.version = 11 : i64} {
  func.func @_decoder_kernel(%arg0: i32, %arg1: i32, %arg2: memref<8x128xf32, #tpu.memory_space<vmem>>, %arg3: memref<128x128xf32, #tpu.memory_space<vmem>>, %arg4: memref<1x128xf32, #tpu.memory_space<vmem>>, %arg5: memref<128x128xf32, #tpu.memory_space<vmem>>, %arg6: memref<1x128xf32, #tpu.memory_space<vmem>>, %arg7: memref<8x128xf32, #tpu.memory_space<vmem>>) attributes {dimension_semantics = [#tpu.dimension_semantics<parallel>, #tpu.dimension_semantics<parallel>], iteration_bounds = array<i64: 1, 1>, scalar_prefetch = 0 : i64, scratch_operands = 0 : i64, tpu.core_type = #tpu.core_type<tc>, window_params = [{transform_indices = @transform_0, window_bounds = array<i64: 8, 128>}, {pipeline_mode = #tpu.pipeline_mode<synchronous>, transform_indices = @transform_1, window_bounds = array<i64: 128, 128>}, {pipeline_mode = #tpu.pipeline_mode<synchronous>, transform_indices = @transform_2, window_bounds = array<i64: 1, 128>}, {transform_indices = @transform_3, window_bounds = array<i64: 128, 128>}, {transform_indices = @transform_4, window_bounds = array<i64: 1, 128>}, {transform_indices = @transform_5, window_bounds = array<i64: 8, 128>}]} {
    %c0 = arith.constant 0 : index
    %c0_0 = arith.constant 0 : index
    %0 = vector.load %arg2[%c0, %c0_0] : memref<8x128xf32, #tpu.memory_space<vmem>>, vector<8x128xf32>
    %c0_1 = arith.constant 0 : index
    %c0_2 = arith.constant 0 : index
    %1 = vector.load %arg3[%c0_1, %c0_2] : memref<128x128xf32, #tpu.memory_space<vmem>>, vector<128x128xf32>
    %cst = arith.constant dense<0.000000e+00> : vector<8x128xf32>
    %2 = tpu.matmul %0, %1, %cst {dimension_numbers = #tpu.dot_dimension_numbers<[1], [0], [0], [1], [0, 0, 1, 1], [], []>} : vector<8x128xf32>, vector<128x128xf32>, vector<8x128xf32> -> vector<8x128xf32>
    %c0_3 = arith.constant 0 : index
    %c0_4 = arith.constant 0 : index
    %3 = vector.load %arg4[%c0_3, %c0_4] : memref<1x128xf32, #tpu.memory_space<vmem>>, vector<1x128xf32>
    %4 = vector.broadcast %3 : vector<1x128xf32> to vector<8x128xf32>
    %5 = arith.addf %2, %4 : vector<8x128xf32>
    %cst_5 = arith.constant 0.000000e+00 : f32
    %6 = vector.broadcast %cst_5 : f32 to vector<8x128xf32>
    %7 = arith.maximumf %5, %6 : vector<8x128xf32>
    %c0_6 = arith.constant 0 : index
    %c0_7 = arith.constant 0 : index
    %8 = vector.load %arg5[%c0_6, %c0_7] : memref<128x128xf32, #tpu.memory_space<vmem>>, vector<128x128xf32>
    %cst_8 = arith.constant dense<0.000000e+00> : vector<8x128xf32>
    %9 = tpu.matmul %7, %8, %cst_8 {dimension_numbers = #tpu.dot_dimension_numbers<[1], [0], [0], [1], [0, 0, 1, 1], [], []>} : vector<8x128xf32>, vector<128x128xf32>, vector<8x128xf32> -> vector<8x128xf32>
    %c0_9 = arith.constant 0 : index
    %c0_10 = arith.constant 0 : index
    %10 = vector.load %arg6[%c0_9, %c0_10] : memref<1x128xf32, #tpu.memory_space<vmem>>, vector<1x128xf32>
    %11 = vector.broadcast %10 : vector<1x128xf32> to vector<8x128xf32>
    %12 = arith.addf %9, %11 : vector<8x128xf32>
    %13 = arith.negf %12 : vector<8x128xf32>
    %14 = math.exp %13 : vector<8x128xf32>
    %cst_11 = arith.constant 1.000000e+00 : f32
    %15 = vector.broadcast %cst_11 : f32 to vector<8x128xf32>
    %16 = arith.addf %15, %14 : vector<8x128xf32>
    %17 = arith.divf %15, %16 : vector<8x128xf32>
    %c0_12 = arith.constant 0 : index
    %c0_13 = arith.constant 0 : index
    %18 = vector.load %arg7[%c0_12, %c0_13] : memref<8x128xf32, #tpu.memory_space<vmem>>, vector<8x128xf32>
    tpu.vector_store %arg7[%c0_12, %c0_13], %17 {strides = array<i32>} : memref<8x128xf32, #tpu.memory_space<vmem>>, vector<8x128xf32>,
    return
  }
  func.func @transform_0(%arg0: i32, %arg1: i32) -> (i32, i32) {
    %c0_i32 = arith.constant 0 : i32
    %c0_i32_0 = arith.constant 0 : i32
    return %arg0, %c0_i32 : i32, i32
  }
  func.func @transform_1(%arg0: i32, %arg1: i32) -> (i32, i32) {
    %c0_i32 = arith.constant 0 : i32
    %c0_i32_0 = arith.constant 0 : i32
    %c0_i32_1 = arith.constant 0 : i32
    return %c0_i32, %c0_i32_0 : i32, i32
  }
  func.func @transform_2(%arg0: i32, %arg1: i32) -> (i32, i32) {
    %c0_i32 = arith.constant 0 : i32
    %c0_i32_0 = arith.constant 0 : i32
    %c0_i32_1 = arith.constant 0 : i32
    return %c0_i32, %c0_i32_0 : i32, i32
  }
  func.func @transform_3(%arg0: i32, %arg1: i32) -> (i32, i32) {
    %c0_i32 = arith.constant 0 : i32
    %c0_i32_0 = arith.constant 0 : i32
    return %c0_i32, %arg1 : i32, i32
  }
  func.func @transform_4(%arg0: i32, %arg1: i32) -> (i32, i32) {
    %c0_i32 = arith.constant 0 : i32
    %c0_i32_0 = arith.constant 0 : i32
    return %c0_i32, %arg1 : i32, i32
  }
  func.func @transform_5(%arg0: i32, %arg1: i32) -> (i32, i32) {
    %c0_i32 = arith.constant 0 : i32
    return %arg0, %arg1 : i32, i32
  }
}

</mosaic_0001>

<llo_original>
// kernel: base_vae_decoder.1
$region0: #{base_vae_decoder.1}
  #allocation0 [shape = 'u32[]', space=smem, size = 0x4, offset = 0x4, fixed_abs, tag = 'smem constant byte address 0x4 - core index']
  #allocation1 [shape = 'u32[144,128]{1,0:T(1,128)}', space=vmem, size = 0x12000, scoped, tag = 'internal scratch']
  %s0 = inlined_call_operand.vmem [shape: f32[8,128], index: 0, kind: input, shape index: {}]
  %s1 = inlined_call_operand.hbm [shape: f32[128,128], index: 1, kind: input, shape index: {}]
  %s2 = inlined_call_operand.vmem [shape: f32[1,128], index: 2, kind: input, shape index: {}]
  %s3 = inlined_call_operand.hbm [shape: f32[128,128], index: 3, kind: input, shape index: {}]
  %s4 = inlined_call_operand.vmem [shape: f32[1,128], index: 4, kind: input, shape index: {}]
  %s5 = inlined_call_operand.hbm [shape: f32[8,128], index: 5, kind: output, shape index: {}]
  %s6 = sld [smem:[#allocation0]]
  $region38: #{base_vae_decoder.1} parent=0
    _
  %s8 = ssub.s32 1, %s6
  %s9 = scalar_select 0, %s8, %s6
  $region1: #{base_vae_decoder.1} parent=0
    #allocation2 [shape = 'u8[65536]{0}', space=vmem, size = 0x10000, scoped, tag = 'input window, operand 1, single buffered']
    #allocation3 [shape = 's32[1]{0}', space=sflag, size = 0x4, scoped, tag = 'scoped memory for base_vae_decoder.1']
    #allocation4 [shape = 's32[1]{0}', space=sflag, size = 0x4, scoped, tag = 'scoped memory for base_vae_decoder.1']
    #allocation5 [shape = 'u8[65536]{0}', space=vmem, size = 0x10000, scoped, tag = 'input window, operand 3, single buffered']
    #allocation6 [shape = 's32[1]{0}', space=sflag, size = 0x4, scoped, tag = 'scoped memory for base_vae_decoder.1']
    #allocation7 [shape = 'u8[4096]{0}', space=vmem, size = 0x1000, scoped, tag = 'output window, operand 0, single buffered']
    %10 = vsyncpa [#allocation3], 0
    %11 = vsyncpa [#allocation6], 0
    %12 = vsyncpa [#allocation4], 0
    // Predicated region
    $region2: #{base_vae_decoder.1} parent=1 // pred_check
      _
    $region3: #{base_vae_decoder.1} parent=1 // pred_check_branch
      %14 = sbr.rel (0) target = $region5
    $region4: #{base_vae_decoder.1} parent=1 // pred_region
      _
    $region5: #{base_vae_decoder.1} parent=1 // pred_fallthru
      _
    // Predicated region
    $region6: #{base_vae_decoder.1} parent=1 // pred_check
      _
    $region7: #{base_vae_decoder.1} parent=1 // pred_check_branch
      %16 = sbr.rel (0) target = $region9
    $region8: #{base_vae_decoder.1} parent=1 // pred_region
      %s18 = ssub.s32 2048, 2048
      %19 = vsyncadd [#allocation3], %s18
      %s20 = sshll.u32 [#allocation2], 4
      %s21 = int_to_ptr.vmem [resolvable:$true] %s20
      %26 = dma.hbm_to_vmem [thread:$0]  %s1, 2048, %s21, [#allocation3], 128, 128, 8
    $region9: #{base_vae_decoder.1} parent=1 // pred_fallthru
      _
    // Predicated region
    $region10: #{base_vae_decoder.1} parent=1 // pred_check
      _
    $region11: #{base_vae_decoder.1} parent=1 // pred_check_branch
      %28 = sbr.rel (0) target = $region13
    $region12: #{base_vae_decoder.1} parent=1 // pred_region
      _
    $region13: #{base_vae_decoder.1} parent=1 // pred_fallthru
      _
    // Predicated region
    $region14: #{base_vae_decoder.1} parent=1 // pred_check
      _
    $region15: #{base_vae_decoder.1} parent=1 // pred_check_branch
      %30 = sbr.rel (0) target = $region17
    $region16: #{base_vae_decoder.1} parent=1 // pred_region
      %s32 = ssub.s32 2048, 2048
      %33 = vsyncadd [#allocation6], %s32
      %s34 = sshll.u32 [#allocation5], 4
      %s35 = int_to_ptr.vmem [resolvable:$true] %s34
      %40 = dma.hbm_to_vmem [thread:$0]  %s3, 2048, %s35, [#allocation6], 128, 128, 8
    $region17: #{base_vae_decoder.1} parent=1 // pred_fallthru
      _
    // Predicated region
    $region18: #{base_vae_decoder.1} parent=1 // pred_check
      _
    $region19: #{base_vae_decoder.1} parent=1 // pred_check_branch
      %42 = sbr.rel (0) target = $region21
    $region20: #{base_vae_decoder.1} parent=1 // pred_region
      _
    $region21: #{base_vae_decoder.1} parent=1 // pred_fallthru
      _
    // Predicated region
    $region22: #{base_vae_decoder.1} parent=1 // pred_check
      _
    $region23: #{base_vae_decoder.1} parent=1 // pred_check_branch
      %44 = sbr.rel (0) target = $region25
    $region24: #{base_vae_decoder.1} parent=1 // pred_region
      %45 = dma.done [#allocation3], 2048
    $region25: #{base_vae_decoder.1} parent=1 // pred_fallthru
      _
    // Predicated region
    $region26: #{base_vae_decoder.1} parent=1 // pred_check
      _
    $region27: #{base_vae_decoder.1} parent=1 // pred_check_branch
      %47 = sbr.rel (0) target = $region29
    $region28: #{base_vae_decoder.1} parent=1 // pred_region
      %48 = dma.done [#allocation6], 2048
    $region29: #{base_vae_decoder.1} parent=1 // pred_fallthru
      _
    %v49 = vld [vmem:[%s0] sm:$0xff]
    %v50 = vld [vmem:[#allocation2] sm:$0xff]
    %v51 = vld [vmem:[#allocation2 + $0x8] sm:$0xff]
    %v52 = vld [vmem:[#allocation2 + $0x10] sm:$0xff]
    %v53 = vld [vmem:[#allocation2 + $0x18] sm:$0xff]
    %v54 = vld [vmem:[#allocation2 + $0x20] sm:$0xff]
    %v55 = vld [vmem:[#allocation2 + $0x28] sm:$0xff]
    %v56 = vld [vmem:[#allocation2 + $0x30] sm:$0xff]
    %v57 = vld [vmem:[#allocation2 + $0x38] sm:$0xff]
    %v58 = vld [vmem:[#allocation2 + $0x40] sm:$0xff]
    %v59 = vld [vmem:[#allocation2 + $0x48] sm:$0xff]
    %v60 = vld [vmem:[#allocation2 + $0x50] sm:$0xff]
    %v61 = vld [vmem:[#allocation2 + $0x58] sm:$0xff]
    %v62 = vld [vmem:[#allocation2 + $0x60] sm:$0xff]
    %v63 = vld [vmem:[#allocation2 + $0x68] sm:$0xff]
    %v64 = vld [vmem:[#allocation2 + $0x70] sm:$0xff]
    %v65 = vld [vmem:[#allocation2 + $0x78] sm:$0xff]
    %v66 = vld [vmem:[%s2] sm:$0x1]
    %v68 = vlaneseq
    %v69 = vshrl.u32 %v68, 7
    %v70 = vsub.s32 0, %v69
    %v71 = vrot.slane %v66, %v70
    %73 = vmatprep.subr.mxu0 0.0
    %74 = vmatpush1.msra.mxu0 %v50
    %75 = vmatprep.subr.mxu0 0.0
    %76 = vmatpush1.msra.mxu0 %v51
    %77 = vmatprep.subr.mxu0 0.0
    %78 = vmatpush1.msra.mxu0 %v52
    %79 = vmatprep.subr.mxu0 0.0
    %80 = vmatpush1.msra.mxu0 %v53
    %81 = vmatprep.subr.mxu0 0.0
    %82 = vmatpush1.msra.mxu0 %v54
    %83 = vmatprep.subr.mxu0 0.0
    %84 = vmatpush1.msra.mxu0 %v55
    %85 = vmatprep.subr.mxu0 0.0
    %86 = vmatpush1.msra.mxu0 %v56
    %87 = vmatprep.subr.mxu0 0.0
    %88 = vmatpush1.msra.mxu0 %v57
    %89 = vmatprep.subr.mxu0 0.0
    %90 = vmatpush1.msra.mxu0 %v58
    %91 = vmatprep.subr.mxu0 0.0
    %92 = vmatpush1.msra.mxu0 %v59
    %93 = vmatprep.subr.mxu0 0.0
    %94 = vmatpush1.msra.mxu0 %v60
    %95 = vmatprep.subr.mxu0 0.0
    %96 = vmatpush1.msra.mxu0 %v61
    %97 = vmatprep.subr.mxu0 0.0
    %98 = vmatpush1.msra.mxu0 %v62
    %99 = vmatprep.subr.mxu0 0.0
    %100 = vmatpush1.msra.mxu0 %v63
    %101 = vmatprep.subr.mxu0 0.0
    %102 = vmatpush1.msra.mxu0 %v64
    %103 = vmatprep.subr.mxu0 0.0
    %104 = vmatpush1.msra.mxu0 %v65
    %105 = vmatprep.subr.mxu0 0.0
    %106 = vmatpush1.msra.mxu0 0.0
    %107 = vmatprep.subr.mxu0 0.0
    %108 = vmatpush1.msra.mxu0 0.0
    %109 = vmatprep.subr.mxu0 0.0
    %110 = vmatpush1.msra.mxu0 0.0
    %111 = vmatprep.subr.mxu0 0.0
    %112 = vmatpush1.msra.mxu0 0.0
    %113 = vmatprep.subr.mxu0 0.0
    %114 = vmatpush1.msra.mxu0 0.0
    %115 = vmatprep.subr.mxu0 0.0
    %116 = vmatpush1.msra.mxu0 0.0
    %117 = vmatprep.subr.mxu0 0.0
    %118 = vmatpush1.msra.mxu0 0.0
    %119 = vmatprep.subr.mxu0 0.0
    %120 = vmatpush1.msra.mxu0 0.0
    %121 = vmatprep.subr.mxu0 0.0
    %122 = vmatpush1.msra.mxu0 0.0
    %123 = vmatprep.subr.mxu0 0.0
    %124 = vmatpush1.msra.mxu0 0.0
    %125 = vmatprep.subr.mxu0 0.0
    %126 = vmatpush1.msra.mxu0 0.0
    %127 = vmatprep.subr.mxu0 0.0
    %128 = vmatpush1.msra.mxu0 0.0
    %129 = vmatprep.subr.mxu0 0.0
    %130 = vmatpush1.msra.mxu0 0.0
    %131 = vmatprep.subr.mxu0 0.0
    %132 = vmatpush1.msra.mxu0 0.0
    %133 = vmatprep.subr.mxu0 0.0
    %134 = vmatpush1.msra.mxu0 0.0
    %135 = vmatprep.subr.mxu0 0.0
    %136 = vmatpush1.msra.mxu0 0.0
    %137 = vmatprep.mubr.f32.mxu0 0.0
    %138 = vmatmul.mubr.f32.gmra.mrb[0].mxu0 %v49
    %v139 = vpop.f32.mrb[0].mxu0
    %v140 = vadd.f32 %v71, %v139
    %v141 = vpop.f32.mrb[0].mxu0
    %142 = vdwg.mxu0
    %v143 = vmax.f32 %v140, 0.0
    %v144 = vld [vmem:[#allocation5] sm:$0xff]
    %v145 = vld [vmem:[#allocation5 + $0x8] sm:$0xff]
    %v146 = vld [vmem:[#allocation5 + $0x10] sm:$0xff]
    %v147 = vld [vmem:[#allocation5 + $0x18] sm:$0xff]
    %v148 = vld [vmem:[#allocation5 + $0x20] sm:$0xff]
    %v149 = vld [vmem:[#allocation5 + $0x28] sm:$0xff]
    %v150 = vld [vmem:[#allocation5 + $0x30] sm:$0xff]
    %v151 = vld [vmem:[#allocation5 + $0x38] sm:$0xff]
    %v152 = vld [vmem:[#allocation5 + $0x40] sm:$0xff]
    %v153 = vld [vmem:[#allocation5 + $0x48] sm:$0xff]
    %v154 = vld [vmem:[#allocation5 + $0x50] sm:$0xff]
    %v155 = vld [vmem:[#allocation5 + $0x58] sm:$0xff]
    %v156 = vld [vmem:[#allocation5 + $0x60] sm:$0xff]
    %v157 = vld [vmem:[#allocation5 + $0x68] sm:$0xff]
    %v158 = vld [vmem:[#allocation5 + $0x70] sm:$0xff]
    %v159 = vld [vmem:[#allocation5 + $0x78] sm:$0xff]
    %v160 = vld [vmem:[%s4] sm:$0x1]
    %v162 = vlaneseq
    %v163 = vshrl.u32 %v162, 7
    %v164 = vsub.s32 0, %v163
    %v165 = vrot.slane %v160, %v164
    %167 = vmatprep.subr.mxu0 0.0
    %168 = vmatpush1.msra.mxu0 %v144
    %169 = vmatprep.subr.mxu0 0.0
    %170 = vmatpush1.msra.mxu0 %v145
    %171 = vmatprep.subr.mxu0 0.0
    %172 = vmatpush1.msra.mxu0 %v146
    %173 = vmatprep.subr.mxu0 0.0
    %174 = vmatpush1.msra.mxu0 %v147
    %175 = vmatprep.subr.mxu0 0.0
    %176 = vmatpush1.msra.mxu0 %v148
    %177 = vmatprep.subr.mxu0 0.0
    %178 = vmatpush1.msra.mxu0 %v149
    %179 = vmatprep.subr.mxu0 0.0
    %180 = vmatpush1.msra.mxu0 %v150
    %181 = vmatprep.subr.mxu0 0.0
    %182 = vmatpush1.msra.mxu0 %v151
    %183 = vmatprep.subr.mxu0 0.0
    %184 = vmatpush1.msra.mxu0 %v152
    %185 = vmatprep.subr.mxu0 0.0
    %186 = vmatpush1.msra.mxu0 %v153
    %187 = vmatprep.subr.mxu0 0.0
    %188 = vmatpush1.msra.mxu0 %v154
    %189 = vmatprep.subr.mxu0 0.0
    %190 = vmatpush1.msra.mxu0 %v155
    %191 = vmatprep.subr.mxu0 0.0
    %192 = vmatpush1.msra.mxu0 %v156
    %193 = vmatprep.subr.mxu0 0.0
    %194 = vmatpush1.msra.mxu0 %v157
    %195 = vmatprep.subr.mxu0 0.0
    %196 = vmatpush1.msra.mxu0 %v158
    %197 = vmatprep.subr.mxu0 0.0
    %198 = vmatpush1.msra.mxu0 %v159
    %199 = vmatprep.subr.mxu0 0.0
    %200 = vmatpush1.msra.mxu0 0.0
    %201 = vmatprep.subr.mxu0 0.0
    %202 = vmatpush1.msra.mxu0 0.0
    %203 = vmatprep.subr.mxu0 0.0
    %204 = vmatpush1.msra.mxu0 0.0
    %205 = vmatprep.subr.mxu0 0.0
    %206 = vmatpush1.msra.mxu0 0.0
    %207 = vmatprep.subr.mxu0 0.0
    %208 = vmatpush1.msra.mxu0 0.0
    %209 = vmatprep.subr.mxu0 0.0
    %210 = vmatpush1.msra.mxu0 0.0
    %211 = vmatprep.subr.mxu0 0.0
    %212 = vmatpush1.msra.mxu0 0.0
    %213 = vmatprep.subr.mxu0 0.0
    %214 = vmatpush1.msra.mxu0 0.0
    %215 = vmatprep.subr.mxu0 0.0
    %216 = vmatpush1.msra.mxu0 0.0
    %217 = vmatprep.subr.mxu0 0.0
    %218 = vmatpush1.msra.mxu0 0.0
    %219 = vmatprep.subr.mxu0 0.0
    %220 = vmatpush1.msra.mxu0 0.0
    %221 = vmatprep.subr.mxu0 0.0
    %222 = vmatpush1.msra.mxu0 0.0
    %223 = vmatprep.subr.mxu0 0.0
    %224 = vmatpush1.msra.mxu0 0.0
    %225 = vmatprep.subr.mxu0 0.0
    %226 = vmatpush1.msra.mxu0 0.0
    %227 = vmatprep.subr.mxu0 0.0
    %228 = vmatpush1.msra.mxu0 0.0
    %229 = vmatprep.subr.mxu0 0.0
    %230 = vmatpush1.msra.mxu0 0.0
    %231 = vmatprep.mubr.f32.mxu0 0.0
    %232 = vmatmul.mubr.f32.gmra.mrb[0].mxu0 %v143
    %v233 = vpop.f32.mrb[0].mxu0
    %v234 = vadd.f32 %v165, %v233
    %v235 = vpop.f32.mrb[0].mxu0
    %236 = vdwg.mxu0
    %v237 = vxor.u32 %v234, 2147483648
    %v238 = vmul.f32 %v237, 1.442695
    %v239 = vpow.pop %v238
    %v240 = vadd.f32 %v239, 1.0
    %v241 = vrcp.pop %v240
    %v242 = vmul.f32 1.0, %v241
    %243 = vst [vmem:[#allocation7] sm:$0xff] %v242
    // Predicated region
    $region30: #{base_vae_decoder.1} parent=1 // pred_check
      _
    $region31: #{base_vae_decoder.1} parent=1 // pred_check_branch
      %245 = sbr.rel (0) target = $region33
    $region32: #{base_vae_decoder.1} parent=1 // pred_region
      %s247 = ssub.s32 128, 128
      %248 = vsyncadd [#allocation4], %s247
      %s250 = sshll.u32 [#allocation7], 4
      %s251 = int_to_ptr.vmem [resolvable:$true] %s250
      %253 = dma.vmem_to_hbm [thread:$0]  %s251, 128, %s5, [#allocation4]
    $region33: #{base_vae_decoder.1} parent=1 // pred_fallthru
      _
    // Predicated region
    $region34: #{base_vae_decoder.1} parent=1 // pred_check
      _
    $region35: #{base_vae_decoder.1} parent=1 // pred_check_branch
      %255 = sbr.rel (0) target = $region37
    $region36: #{base_vae_decoder.1} parent=1 // pred_region
      %256 = dma.done [#allocation4], 128
    $region37: #{base_vae_decoder.1} parent=1 // pred_fallthru
      _
    %257 = vsyncpa [#allocation3], 1
    %258 = vsyncpa [#allocation6], 1
    %259 = vsyncpa [#allocation4], 1

</llo_original>
